<compile_context>
chip_gen: v7x
topology: tpu7x:2x2x1
jax: 0.10.0
libtpu: 0.0.40
codegen_flags: <defaults>
</compile_context>

<pallas_src>
import functools

import jax
import jax.numpy as jnp
from jax.experimental import pallas as pl
from jax.experimental.pallas import tpu as pltpu


def _mmd_kernel(x_ref, y_ref, out_ref, *, alpha, s_valid, n_inner):
    """Accumulates per-lane h_i partial sums for one (batch, chunk, tile)."""
    t = pl.program_id(2)

    # The output block's index_map is constant across the inner (reduction)
    # axis, so it stays VMEM-resident: init on the first inner step, then
    # accumulate straight into it (no scratch, no final copy).
    @pl.when(t == 0)
    def _init():
        out_ref[...] = jnp.zeros_like(out_ref)

    # (C, L): channels on sublanes, spatial positions on lanes.  Keep native
    # dtype through the lane shift; upcast only inside the distance compute.
    x = x_ref[0]
    y = y_ref[0]
    lanes = x.shape[-1]

    def rot1(a):
        # a[:, j] -> a[:, (j+1) mod L]: the partner sample of position j.
        # Slice + concat lowers to a single lane shift on Mosaic and is safe
        # in interpret mode.  The wrapped lane (j = L-1, odd) is masked below.
        return jnp.concatenate([a[:, 1:], a[:, :1]], axis=1)

    xr = rot1(x)
    yr = rot1(y)

    def rbf(a, b):
        d = a.astype(jnp.float32) - b.astype(jnp.float32)
        d2 = jnp.sum(d * d, axis=0, keepdims=True)        # (1, L) sublane reduce
        return jnp.exp((-alpha) * d2)

    # Four separate exps (EUP has large slack here); avoids the sublane-concat
    # relayout of stacking the 4 distances.
    h = (rbf(x, xr) + rbf(y, yr)) - (rbf(x, yr) + rbf(xr, y))   # (1, L)

    # Only even spatial positions carry a valid (2i, 2i+1) pair; also mask the
    # padded tail of the last tile and any clamped overflow tile.  Garbage
    # lanes flow through exp but are SELECT-masked (never multiplied) away.
    g = pl.program_id(1) * n_inner + t                     # global lane-tile idx
    lane = jax.lax.broadcasted_iota(jnp.int32, (1, lanes), 1)
    pos = g * lanes + lane
    valid = ((lane & 1) == 0) & (pos < s_valid)
    out_ref[...] += jnp.where(valid, h, 0.0).reshape(out_ref.shape)


def _vmem_plan(s, c, itemsize):
    """Pick (lane_tile, vmem_limit_bytes): generation- and intermediate-aware."""
    try:
        vmem_cap = int(pltpu.get_tpu_info().vmem_capacity_bytes)
    except Exception:
        vmem_cap = 64 * 1024 * 1024      # conservative default (v7x per-TC)
    # Per lane of one tile:
    #   pipelined input blocks : 2 streams x 2 buffers x C x itemsize
    #   f32 in-kernel temps    : ~6 x C x 4  (upcast diffs + rotated copies)
    #   output / iota / masks  : ~32 B
    per_lane = 4 * c * itemsize + 6 * c * 4 + 32
    budget = min(int(vmem_cap * 0.6), 96 * 1024 * 1024)
    max_lanes = 8192 if vmem_cap > 80 * 1024 * 1024 else 4096
    cand = max(128, (budget // per_lane) // 128 * 128)
    cand = int(min(cand, max_lanes))
    tile = int(s) if cand >= s else cand
    working = per_lane * max(tile, 128)
    vmem_limit = int(min(vmem_cap, max(working + (4 << 20), 32 << 20)))
    return tile, vmem_limit


@functools.partial(jax.jit, static_argnums=(2,))
def linear_time_mmd_pallas(x_nchw, y_nchw, alpha):
    """Linear-time MMD^2 between feature maps x and y (both NCHW)."""
    assert x_nchw.shape == y_nchw.shape
    n, c, hh, ww = x_nchw.shape
    s = hh * ww
    m = n * s
    n_pairs = m // 2
    assert n_pairs > 0

    if s % 2 == 0:
        # Fast path: pairs never cross batch rows, and (N, C, H*W) is a free
        # reshape of NCHW -- no extra HBM traffic before the kernel.
        x3 = x_nchw.reshape(n, c, s)
        y3 = y_nchw.reshape(n, c, s)
        s_valid = s
    else:
        # Rare path (odd H*W, e.g. 7x7): pairs cross batch rows, so flatten
        # everything into one lane-dense (1, C, M) row.
        # TODO(synk): avoid this HBM transpose by masking per-row parity in the
        # kernel and computing the few boundary-crossing pairs in the wrapper.
        m_even = 2 * n_pairs
        x3 = jnp.transpose(x_nchw, (1, 0, 2, 3)).reshape(c, m)[:, :m_even]
        y3 = jnp.transpose(y_nchw, (1, 0, 2, 3)).reshape(c, m)[:, :m_even]
        x3 = x3.reshape(1, c, m_even)
        y3 = y3.reshape(1, c, m_even)
        s_valid = m_even

    b, _, sv = x3.shape
    itemsize = max(jnp.dtype(x3.dtype).itemsize, jnp.dtype(y3.dtype).itemsize)
    tile_s, vmem_limit = _vmem_plan(sv, c, itemsize)

    n_total = pl.cdiv(sv, tile_s)
    # 2-way "parallel" outer split of the spatial tiles so both of v7x's two
    # TensorCores get work even when N == 1 (no effect on 1-TC chips).
    if n_total >= 2:
        n_outer = 2
        n_inner = (n_total + 1) // 2
    else:
        n_outer, n_inner = 1, n_total
    last_tile = n_total - 1

    def feat_idx(i, o, t):
        # Clamp overflow steps of an uneven outer split onto the last real
        # tile; the kernel zero-masks their contribution via `pos < s_valid`.
        return (i, 0, jnp.minimum(o * n_inner + t, last_tile))

    feat_spec = pl.BlockSpec((1, c, tile_s), feat_idx)
    out_spec = pl.BlockSpec((1, 1, 1, tile_s), lambda i, o, t: (i, o, 0, 0))

    kernel = functools.partial(
        _mmd_kernel, alpha=float(alpha), s_valid=int(s_valid), n_inner=int(n_inner))

    partials = pl.pallas_call(
        kernel,
        out_shape=jax.ShapeDtypeStruct((b, n_outer, 1, tile_s), jnp.float32),
        grid=(b, n_outer, n_inner),
        in_specs=[feat_spec, feat_spec],
        out_specs=out_spec,
        compiler_params=pltpu.CompilerParams(
            dimension_semantics=("parallel", "parallel", "arbitrary"),
            vmem_limit_bytes=vmem_limit,
        ),
    )(x3, y3)

    return jnp.sum(partials) / jnp.float32(n_pairs)


class StyleLossMMDPallas:
    """JAX/Pallas port of StyleLossMMD: forward returns input, stores .loss."""

    def __init__(self, target_feature, alpha=1.0 / 10.0):
        self.target = jax.lax.stop_gradient(target_feature)
        self.alpha = float(alpha)
        self.loss = jnp.float32(0.0)

    def __call__(self, x):
        self.loss = linear_time_mmd_pallas(x, self.target, self.alpha)
        return x


def _linear_time_mmd_ref(x_nchw, y_nchw, alpha):
    """Pure-JAX reference for correctness check."""
    n, c, h, w = x_nchw.shape
    x = jnp.transpose(x_nchw, (0, 2, 3, 1)).reshape(-1, c).astype(jnp.float32)
    y = jnp.transpose(y_nchw, (0, 2, 3, 1)).reshape(-1, c).astype(jnp.float32)
    n_pairs = x.shape[0] // 2
    xe, xo = x[0:2 * n_pairs:2], x[1:2 * n_pairs:2]
    ye, yo = y[0:2 * n_pairs:2], y[1:2 * n_pairs:2]

    def rbf(a, b):
        return jnp.exp(-alpha * jnp.sum((a - b) ** 2, axis=-1))

    hvals = rbf(xe, xo) + rbf(ye, yo) - rbf(xe, yo) - rbf(xo, ye)
    return jnp.mean(hvals)


if __name__ == "__main__":
    key = jax.random.PRNGKey(0)
    k_in, k_tgt, k_in2, k_tgt2 = jax.random.split(key, 4)

    # Primary shape: NCHW conv-style features, batch=2, channels=4, 16x16.
    x = jax.random.normal(k_in, (2, 4, 16, 16), dtype=jnp.float32)
    target = jax.random.normal(k_tgt, (2, 4, 16, 16), dtype=jnp.float32)

    module = StyleLossMMDPallas(target, alpha=1.0 / 10.0)
    out = jax.block_until_ready(module(x))
    loss = jax.block_until_ready(module.loss)
    ref = jax.block_until_ready(_linear_time_mmd_ref(x, target, 1.0 / 10.0))
    assert out.shape == x.shape and bool(jnp.allclose(out, x))
    assert bool(jnp.allclose(loss, ref, rtol=1e-4, atol=1e-5)), (loss, ref)

    # Second shape exercises the multi-tile grid, the 2-way outer split and
    # padded-tail lane masking (H*W = 5184 > one lane tile).
    x2 = jax.random.normal(k_in2, (1, 4, 72, 72), dtype=jnp.float32)
    t2 = jax.random.normal(k_tgt2, (1, 4, 72, 72), dtype=jnp.float32)
    loss2 = jax.block_until_ready(linear_time_mmd_pallas(x2, t2, 1.0 / 10.0))
    ref2 = jax.block_until_ready(_linear_time_mmd_ref(x2, t2, 1.0 / 10.0))
    assert bool(jnp.allclose(loss2, ref2, rtol=1e-4, atol=1e-5)), (loss2, ref2)

    print("KERNEL_OK")
</pallas_src>

<mosaic_0001>
module attributes {stable_mosaic.version = 11 : i64} {
  func.func @_mmd_kernel(%arg0: i32, %arg1: i32, %arg2: i32, %arg3: memref<1x4x256xf32, #tpu.memory_space<vmem>>, %arg4: memref<1x4x256xf32, #tpu.memory_space<vmem>>, %arg5: memref<1x1x1x256xf32, #tpu.memory_space<vmem>>) attributes {dimension_semantics = [#tpu.dimension_semantics<parallel>, #tpu.dimension_semantics<parallel>, #tpu.dimension_semantics<arbitrary>], iteration_bounds = array<i64: 2, 1, 1>, scalar_prefetch = 0 : i64, scratch_operands = 0 : i64, tpu.core_type = #tpu.core_type<tc>, window_params = [{transform_indices = @transform_0, window_bounds = array<i64: 1, 4, 256>}, {transform_indices = @transform_1, window_bounds = array<i64: 1, 4, 256>}, {transform_indices = @transform_2, window_bounds = array<i64: 1, 1, 1, 256>}]} {
    %c0_i32 = arith.constant 0 : i32
    %0 = arith.cmpi eq, %arg2, %c0_i32 : i32
    %1 = arith.extui %0 : i1 to i32
    %c0_i32_0 = arith.constant 0 : i32
    %2 = arith.cmpi ne, %1, %c0_i32_0 : i32
    scf.if %2 {
      %cst_25 = arith.constant 0.000000e+00 : f32
      %63 = vector.broadcast %cst_25 : f32 to vector<1x1x1x256xf32>
      %c0_26 = arith.constant 0 : index
      %c0_27 = arith.constant 0 : index
      %c0_28 = arith.constant 0 : index
      %c0_29 = arith.constant 0 : index
      %64 = vector.load %arg5[%c0_26, %c0_27, %c0_28, %c0_29] : memref<1x1x1x256xf32, #tpu.memory_space<vmem>>, vector<1x1x1x256xf32>
      tpu.vector_store %arg5[%c0_26, %c0_27, %c0_28, %c0_29], %63 {strides = array<i32>} : memref<1x1x1x256xf32, #tpu.memory_space<vmem>>, vector<1x1x1x256xf32>,
    } else {
    }
    %c0 = arith.constant 0 : index
    %c0_1 = arith.constant 0 : index
    %c0_2 = arith.constant 0 : index
    %3 = vector.load %arg3[%c0, %c0_1, %c0_2] : memref<1x4x256xf32, #tpu.memory_space<vmem>>, vector<1x4x256xf32>
    %4 = vector.shape_cast %3 : vector<1x4x256xf32> to vector<4x256xf32>
    %c0_3 = arith.constant 0 : index
    %c0_4 = arith.constant 0 : index
    %c0_5 = arith.constant 0 : index
    %5 = vector.load %arg4[%c0_3, %c0_4, %c0_5] : memref<1x4x256xf32, #tpu.memory_space<vmem>>, vector<1x4x256xf32>
    %6 = vector.shape_cast %5 : vector<1x4x256xf32> to vector<4x256xf32>
    %7 = vector.extract_strided_slice %4 {offsets = [0, 1], sizes = [4, 255], strides = [1, 1]} : vector<4x256xf32> to vector<4x255xf32>
    %8 = vector.extract_strided_slice %4 {offsets = [0, 0], sizes = [4, 1], strides = [1, 1]} : vector<4x256xf32> to vector<4x1xf32>
    %9 = tpu.concatenate %7, %8 in 1 : vector<4x255xf32>, vector<4x1xf32> -> vector<4x256xf32>
    %10 = vector.extract_strided_slice %6 {offsets = [0, 1], sizes = [4, 255], strides = [1, 1]} : vector<4x256xf32> to vector<4x255xf32>
    %11 = vector.extract_strided_slice %6 {offsets = [0, 0], sizes = [4, 1], strides = [1, 1]} : vector<4x256xf32> to vector<4x1xf32>
    %12 = tpu.concatenate %10, %11 in 1 : vector<4x255xf32>, vector<4x1xf32> -> vector<4x256xf32>
    %13 = arith.subf %4, %9 : vector<4x256xf32>
    %14 = arith.mulf %13, %13 : vector<4x256xf32>
    %cst = arith.constant dense<0.000000e+00> : vector<256xf32>
    %15 = vector.multi_reduction <add>, %14, %cst [0] : vector<4x256xf32> to vector<256xf32>
    %16 = vector.shape_cast %15 : vector<256xf32> to vector<1x256xf32>
    %cst_6 = arith.constant -1.000000e-01 : f32
    %17 = vector.broadcast %cst_6 : f32 to vector<1x256xf32>
    %18 = arith.mulf %17, %16 : vector<1x256xf32>
    %19 = math.exp %18 : vector<1x256xf32>
    %20 = arith.subf %6, %12 : vector<4x256xf32>
    %21 = arith.mulf %20, %20 : vector<4x256xf32>
    %cst_7 = arith.constant dense<0.000000e+00> : vector<256xf32>
    %22 = vector.multi_reduction <add>, %21, %cst_7 [0] : vector<4x256xf32> to vector<256xf32>
    %23 = vector.shape_cast %22 : vector<256xf32> to vector<1x256xf32>
    %cst_8 = arith.constant -1.000000e-01 : f32
    %24 = vector.broadcast %cst_8 : f32 to vector<1x256xf32>
    %25 = arith.mulf %24, %23 : vector<1x256xf32>
    %26 = math.exp %25 : vector<1x256xf32>
    %27 = arith.addf %19, %26 : vector<1x256xf32>
    %28 = arith.subf %4, %12 : vector<4x256xf32>
    %29 = arith.mulf %28, %28 : vector<4x256xf32>
    %cst_9 = arith.constant dense<0.000000e+00> : vector<256xf32>
    %30 = vector.multi_reduction <add>, %29, %cst_9 [0] : vector<4x256xf32> to vector<256xf32>
    %31 = vector.shape_cast %30 : vector<256xf32> to vector<1x256xf32>
    %cst_10 = arith.constant -1.000000e-01 : f32
    %32 = vector.broadcast %cst_10 : f32 to vector<1x256xf32>
    %33 = arith.mulf %32, %31 : vector<1x256xf32>
    %34 = math.exp %33 : vector<1x256xf32>
    %35 = arith.subf %9, %6 : vector<4x256xf32>
    %36 = arith.mulf %35, %35 : vector<4x256xf32>
    %cst_11 = arith.constant dense<0.000000e+00> : vector<256xf32>
    %37 = vector.multi_reduction <add>, %36, %cst_11 [0] : vector<4x256xf32> to vector<256xf32>
    %38 = vector.shape_cast %37 : vector<256xf32> to vector<1x256xf32>
    %cst_12 = arith.constant -1.000000e-01 : f32
    %39 = vector.broadcast %cst_12 : f32 to vector<1x256xf32>
    %40 = arith.mulf %39, %38 : vector<1x256xf32>
    %41 = math.exp %40 : vector<1x256xf32>
    %42 = arith.addf %34, %41 : vector<1x256xf32>
    %43 = arith.subf %27, %42 : vector<1x256xf32>
    %c1_i32 = arith.constant 1 : i32
    %44 = arith.muli %arg1, %c1_i32 : i32
    %45 = arith.addi %44, %arg2 : i32
    %46 = tpu.iota {dimensions = array<i32: 1>} : vector<1x256xi32>
    %c256_i32 = arith.constant 256 : i32
    %47 = arith.muli %45, %c256_i32 : i32
    %48 = vector.broadcast %47 : i32 to vector<1x256xi32>
    %49 = arith.addi %48, %46 : vector<1x256xi32>
    %c1_i32_13 = arith.constant 1 : i32
    %50 = vector.broadcast %c1_i32_13 : i32 to vector<1x256xi32>
    %51 = arith.andi %46, %50 : vector<1x256xi32>
    %c0_i32_14 = arith.constant 0 : i32
    %52 = vector.broadcast %c0_i32_14 : i32 to vector<1x256xi32>
    %53 = arith.cmpi eq, %51, %52 : vector<1x256xi32>
    %c256_i32_15 = arith.constant 256 : i32
    %54 = vector.broadcast %c256_i32_15 : i32 to vector<1x256xi32>
    %55 = arith.cmpi slt, %49, %54 : vector<1x256xi32>
    %56 = arith.andi %53, %55 : vector<1x256xi1>
    %c0_16 = arith.constant 0 : index
    %c0_17 = arith.constant 0 : index
    %c0_18 = arith.constant 0 : index
    %c0_19 = arith.constant 0 : index
    %57 = vector.load %arg5[%c0_16, %c0_17, %c0_18, %c0_19] : memref<1x1x1x256xf32, #tpu.memory_space<vmem>>, vector<1x1x1x256xf32>
    %cst_20 = arith.constant 0.000000e+00 : f32
    %58 = vector.broadcast %cst_20 : f32 to vector<1x256xf32>
    %59 = arith.select %56, %43, %58 : vector<1x256xi1>, vector<1x256xf32>
    %60 = vector.shape_cast %59 : vector<1x256xf32> to vector<1x1x1x256xf32>
    %61 = arith.addf %57, %60 : vector<1x1x1x256xf32>
    %c0_21 = arith.constant 0 : index
    %c0_22 = arith.constant 0 : index
    %c0_23 = arith.constant 0 : index
    %c0_24 = arith.constant 0 : index
    %62 = vector.load %arg5[%c0_21, %c0_22, %c0_23, %c0_24] : memref<1x1x1x256xf32, #tpu.memory_space<vmem>>, vector<1x1x1x256xf32>
    tpu.vector_store %arg5[%c0_21, %c0_22, %c0_23, %c0_24], %61 {strides = array<i32>} : memref<1x1x1x256xf32, #tpu.memory_space<vmem>>, vector<1x1x1x256xf32>,
    return
  }
  func.func @transform_0(%arg0: i32, %arg1: i32, %arg2: i32) -> (i32, i32, i32) {
    %c1_i32 = arith.constant 1 : i32
    %0 = arith.muli %arg1, %c1_i32 : i32
    %1 = arith.addi %0, %arg2 : i32
    %c0_i32 = arith.constant 0 : i32
    %2 = arith.minsi %1, %c0_i32 : i32
    %c0_i32_0 = arith.constant 0 : i32
    %c0_i32_1 = arith.constant 0 : i32
    return %arg0, %c0_i32_0, %2 : i32, i32, i32
  }
  func.func @transform_1(%arg0: i32, %arg1: i32, %arg2: i32) -> (i32, i32, i32) {
    %c1_i32 = arith.constant 1 : i32
    %0 = arith.muli %arg1, %c1_i32 : i32
    %1 = arith.addi %0, %arg2 : i32
    %c0_i32 = arith.constant 0 : i32
    %2 = arith.minsi %1, %c0_i32 : i32
    %c0_i32_0 = arith.constant 0 : i32
    %c0_i32_1 = arith.constant 0 : i32
    return %arg0, %c0_i32_0, %2 : i32, i32, i32
  }
  func.func @transform_2(%arg0: i32, %arg1: i32, %arg2: i32) -> (i32, i32, i32, i32) {
    %c0_i32 = arith.constant 0 : i32
    %c0_i32_0 = arith.constant 0 : i32
    %c0_i32_1 = arith.constant 0 : i32
    return %arg0, %arg1, %c0_i32, %c0_i32_0 : i32, i32, i32, i32
  }
}

</mosaic_0001>

<llo_original>
// kernel: linear_time_mmd_pallas.1
$region0: #{linear_time_mmd_pallas.1}
  #allocation0 [shape = 'u32[]', space=smem, size = 0x4, offset = 0x4, fixed_abs, tag = 'smem constant byte address 0x4 - core index']
  #allocation1 [shape = 'u32[144,128]{1,0:T(1,128)}', space=vmem, size = 0x12000, scoped, tag = 'internal scratch']
  %s0 = inlined_call_operand.vmem [shape: f32[2,4,256], index: 0, kind: input, shape index: {}]
  %s1 = inlined_call_operand.vmem [shape: f32[2,4,256], index: 1, kind: input, shape index: {}]
  %s2 = inlined_call_operand.vmem [shape: f32[2,1,1,256], index: 2, kind: output, shape index: {}]
  %s3 = sld [smem:[#allocation0]]
  $region45: #{linear_time_mmd_pallas.1} parent=0
    _
  %s5 = ssub.s32 1, %s3
  %s6 = scalar_select 0, %s5, %s3
  loop: start=0, step=1, limit=4
  $region2: #{linear_time_mmd_pallas.1} parent=0 // loop_pre_header
    _
  $region3: #{linear_time_mmd_pallas.1} parent=0 // loop_header
    %s8 = sphi 0, %s12
    %p9 = scmp.ge.s32.totalorder %s8, 4
    %s15 = sphi 0, %s34
    %s16 = sphi 0, %s30
    %s17 = sphi 0, %s26
    %s18 = sphi 0, %s15
    %s19 = sphi 0, %s16
    %s20 = sphi 0, %s17
    %s21 = sphi 0, %s18
    %s22 = sphi 0, %s19
    %s23 = sphi 0, %s20
    %s45 = sphi 0, %s47
    %s48 = sphi 0, %s45
    %s49 = sphi 0, %s48
    %s65 = sphi 0, %s49
    %s79 = sphi 0, %s81
    %s82 = sphi 0, %s79
    %s83 = sphi 0, %s82
    %s99 = sphi 0, %s83
    %s107 = sphi 0, %s109
    %s110 = sphi 0, %s107
    %s111 = sphi 0, %s110
    %s127 = sphi 0, %s111
  $region4: #{linear_time_mmd_pallas.1} parent=0 // loop_header_branch
    %11 = sbr.rel (%p9) target = $region8
  $region5: #{linear_time_mmd_pallas.1} parent=0 // loop_body
    %s13 = ssub.s32 %s8, 1
    %s14 = ssub.s32 %s8, 2
    %s24 = sadd.s32 1, %s17
    %p25 = scmp.ge.s32.totalorder %s24, 1
    %s26 = scalar_select %p25, 0, %s24
    %s27 = sadd.s32 1, %s16
    %s28 = scalar_select %p25, %s27, %s16
    %p29 = scmp.ge.s32.totalorder %s28, 1
    %s30 = scalar_select %p29, 0, %s28
    %s31 = sadd.s32 1, %s15
    %s32 = scalar_select %p29, %s31, %s15
    %p33 = scmp.ge.s32.totalorder %s32, 2
    %s34 = scalar_select %p33, 0, %s32
    %s35 = sadd.s32 %s16, %s17
    %p36 = scmp.lt.s32.totalorder %s35, 0
    %s37 = scalar_select %p36, %s35, 0
    %s38 = sadd.s32 %s30, %s26
    %p39 = scmp.lt.s32.totalorder %s38, 0
    %s40 = scalar_select %p39, %s38, 0
    %s41 = ssub.s32 %s15, %s34
    %s42 = ssub.s32 %s37, %s40
    %s43 = sor.u32 %s41, %s42
    %p44 = scmp.eq.s32.totalorder %s43, 0
    %s46 = sadd.s32 %s45, 1
    %s47 = scalar_select %p44, %s45, %s46
    %p50 = pneg %p44
    %p51 = scmp.eq.s32.totalorder %s8, 1
    %p52 = por %p50, %p51
    %p53 = scmp.ne.s32.totalorder %s45, %s48
    %p54 = scmp.eq.s32.totalorder %s8, 0
    %p55 = por %p53, %p54
    %p56 = scmp.ne.s32.totalorder %s45, %s48
    %p57 = scmp.eq.s32.totalorder %s13, 1
    %p58 = por %p56, %p57
    %p59 = scmp.ne.s32.totalorder %s48, %s49
    %p60 = scmp.eq.s32.totalorder %s13, 0
    %p61 = por %p59, %p60
    %p62 = scmp.ne.s32.totalorder %s48, %s49
    %p63 = scmp.eq.s32.totalorder %s14, 1
    %p64 = por %p62, %p63
    %p66 = scmp.ne.s32.totalorder %s49, %s65
    %p67 = scmp.eq.s32.totalorder %s14, 0
    %p68 = por %p66, %p67
    %s69 = sadd.s32 %s16, %s17
    %p70 = scmp.lt.s32.totalorder %s69, 0
    %s71 = scalar_select %p70, %s69, 0
    %s72 = sadd.s32 %s30, %s26
    %p73 = scmp.lt.s32.totalorder %s72, 0
    %s74 = scalar_select %p73, %s72, 0
    %s75 = ssub.s32 %s15, %s34
    %s76 = ssub.s32 %s71, %s74
    %s77 = sor.u32 %s75, %s76
    %p78 = scmp.eq.s32.totalorder %s77, 0
    %s80 = sadd.s32 %s79, 1
    %s81 = scalar_select %p78, %s79, %s80
    %p84 = pneg %p78
    %p85 = scmp.eq.s32.totalorder %s8, 1
    %p86 = por %p84, %p85
    %p87 = scmp.ne.s32.totalorder %s79, %s82
    %p88 = scmp.eq.s32.totalorder %s8, 0
    %p89 = por %p87, %p88
    %p90 = scmp.ne.s32.totalorder %s79, %s82
    %p91 = scmp.eq.s32.totalorder %s13, 1
    %p92 = por %p90, %p91
    %p93 = scmp.ne.s32.totalorder %s82, %s83
    %p94 = scmp.eq.s32.totalorder %s13, 0
    %p95 = por %p93, %p94
    %p96 = scmp.ne.s32.totalorder %s82, %s83
    %p97 = scmp.eq.s32.totalorder %s14, 1
    %p98 = por %p96, %p97
    %p100 = scmp.ne.s32.totalorder %s83, %s99
    %p101 = scmp.eq.s32.totalorder %s14, 0
    %p102 = por %p100, %p101
    %s103 = ssub.s32 %s15, %s34
    %s104 = ssub.s32 %s16, %s30
    %s105 = sor.u32 %s103, %s104
    %p106 = scmp.eq.s32.totalorder %s105, 0
    %s108 = sadd.s32 %s107, 1
    %s109 = scalar_select %p106, %s107, %s108
    %p112 = pneg %p106
    %p113 = scmp.eq.s32.totalorder %s8, 1
    %p114 = por %p112, %p113
    %p115 = scmp.ne.s32.totalorder %s107, %s110
    %p116 = scmp.eq.s32.totalorder %s8, 0
    %p117 = por %p115, %p116
    %p118 = scmp.ne.s32.totalorder %s107, %s110
    %p119 = scmp.eq.s32.totalorder %s13, 1
    %p120 = por %p118, %p119
    %p121 = scmp.ne.s32.totalorder %s110, %s111
    %p122 = scmp.eq.s32.totalorder %s13, 0
    %p123 = por %p121, %p122
    %p124 = scmp.ne.s32.totalorder %s110, %s111
    %p125 = scmp.eq.s32.totalorder %s14, 1
    %p126 = por %p124, %p125
    %p128 = scmp.ne.s32.totalorder %s111, %s127
    %p129 = scmp.eq.s32.totalorder %s14, 0
    %p130 = por %p128, %p129
    %p131 = scmp.le.s32.totalorder 1, %s8
    %p132 = scmp.lt.s32.totalorder %s8, 3
    %p133 = pnand %p131, %p132
    %p134 = pneg %p133
    // Predicated region
    $region9: #{linear_time_mmd_pallas.1} parent=5 // pred_check
      _
    $region10: #{linear_time_mmd_pallas.1} parent=5 // pred_check_branch
      %136 = sbr.rel (%p133) target = $region12
    $region11: #{linear_time_mmd_pallas.1} parent=5 // pred_region
      %s137 = ssub.s32 %s8, 1
    $region12: #{linear_time_mmd_pallas.1} parent=5 // pred_fallthru
      _
    %p138 = scmp.lt.s32.totalorder %s8, 2
    // Predicated region
    $region13: #{linear_time_mmd_pallas.1} parent=5 // pred_check
      %p139 = pneg %p138
    $region14: #{linear_time_mmd_pallas.1} parent=5 // pred_check_branch
      %141 = sbr.rel (%p139) target = $region16
    $region15: #{linear_time_mmd_pallas.1} parent=5 // pred_region
      // Predicated region
      $region17: #{linear_time_mmd_pallas.1} parent=15 // pred_check
        %p142 = pneg %p55
      $region18: #{linear_time_mmd_pallas.1} parent=15 // pred_check_branch
        %144 = sbr.rel (%p142) target = $region20
      $region19: #{linear_time_mmd_pallas.1} parent=15 // pred_region
        %s145 = sadd.s32 %s16, %s17
        %p146 = scmp.lt.s32.totalorder %s145, 0
        %s147 = scalar_select %p146, %s145, 0
        %s148 = smul.u32 2, %s147
        %p149 = scmp.lt.s32.totalorder %s15, 1
        %s150 = scalar_select %p149, %s15, 1
        %p151 = scmp.lt.s32.totalorder %s148, 1
        %s152 = scalar_select %p151, %s148, 1
        %s153 = smul.addr %s150, 2
        %s154 = sadd.s32 %s152, %s153
        %s155 = smul.addr %s154, 4
        %s156 = scalar_lea.vmem %s0, %s155
        %s157 = sadd.s32 %s16, %s17
        %p158 = scmp.lt.s32.totalorder %s157, 0
        %s159 = scalar_select %p158, %s157, 0
        %s160 = smul.u32 2, %s159
      $region20: #{linear_time_mmd_pallas.1} parent=15 // pred_fallthru
        _
      // Predicated region
      $region21: #{linear_time_mmd_pallas.1} parent=15 // pred_check
        %p161 = pneg %p89
      $region22: #{linear_time_mmd_pallas.1} parent=15 // pred_check_branch
        %163 = sbr.rel (%p161) target = $region24
      $region23: #{linear_time_mmd_pallas.1} parent=15 // pred_region
        %s164 = sadd.s32 %s16, %s17
        %p165 = scmp.lt.s32.totalorder %s164, 0
        %s166 = scalar_select %p165, %s164, 0
        %s167 = smul.u32 2, %s166
        %p168 = scmp.lt.s32.totalorder %s15, 1
        %s169 = scalar_select %p168, %s15, 1
        %p170 = scmp.lt.s32.totalorder %s167, 1
        %s171 = scalar_select %p170, %s167, 1
        %s172 = smul.addr %s169, 2
        %s173 = sadd.s32 %s171, %s172
        %s174 = smul.addr %s173, 4
        %s175 = scalar_lea.vmem %s1, %s174
        %s176 = sadd.s32 %s16, %s17
        %p177 = scmp.lt.s32.totalorder %s176, 0
        %s178 = scalar_select %p177, %s176, 0
        %s179 = smul.u32 2, %s178
      $region24: #{linear_time_mmd_pallas.1} parent=15 // pred_fallthru
        _
    $region16: #{linear_time_mmd_pallas.1} parent=5 // pred_fallthru
      _
    %p180 = scmp.le.s32.totalorder 1, %s8
    %p181 = scmp.lt.s32.totalorder %s8, 3
    %p182 = pnand %p180, %p181
    %p183 = pneg %p182
    // Predicated region
    $region25: #{linear_time_mmd_pallas.1} parent=5 // pred_check
      _
    $region26: #{linear_time_mmd_pallas.1} parent=5 // pred_check_branch
      %185 = sbr.rel (%p182) target = $region28
    $region27: #{linear_time_mmd_pallas.1} parent=5 // pred_region
      %s186 = ssub.s32 %s8, 1
      %s187 = sadd.s32 %s19, %s20
      %p188 = scmp.lt.s32.totalorder %s187, 0
      %s189 = scalar_select %p188, %s187, 0
      %s190 = smul.u32 2, %s189
      %p191 = scmp.lt.s32.totalorder %s18, 1
      %s192 = scalar_select %p191, %s18, 1
      %p193 = scmp.lt.s32.totalorder %s190, 1
      %s194 = scalar_select %p193, %s190, 1
      %s195 = smul.addr %s192, 2
      %s196 = sadd.s32 %s194, %s195
      %s197 = smul.addr %s196, 4
      %s198 = scalar_lea.vmem %s0, %s197
      %p199 = pneg %p61
      %p200 = pneg %p58
      %s201 = sadd.s32 %s19, %s20
      %p202 = scmp.lt.s32.totalorder %s201, 0
      %s203 = scalar_select %p202, %s201, 0
      %s204 = smul.u32 2, %s203
      %p205 = scmp.lt.s32.totalorder %s18, 1
      %s206 = scalar_select %p205, %s18, 1
      %p207 = scmp.lt.s32.totalorder %s204, 1
      %s208 = scalar_select %p207, %s204, 1
      %s209 = smul.addr %s206, 2
      %s210 = sadd.s32 %s208, %s209
      %s211 = smul.addr %s210, 4
      %s212 = scalar_lea.vmem %s1, %s211
      %p213 = pneg %p95
      %p214 = pneg %p92
      %p215 = pneg %p123
      %p216 = pneg %p120
      %p217 = scmp.lt.s32.totalorder %s18, 1
      %s218 = scalar_select %p217, %s18, 1
      %p219 = scmp.lt.s32.totalorder %s19, 0
      %s220 = scalar_select %p219, %s19, 0
      %s221 = smul.addr %s220, 2
      %s222 = smul.addr %s218, 2
      %s223 = sadd.s32 %s221, %s222
      %s224 = scalar_lea.vmem %s2, %s223
      %s225 = sadd.s32 %s19, %s20
      %p226 = scmp.lt.s32.totalorder %s225, 0
      %s227 = scalar_select %p226, %s225, 0
      %s228 = smul.u32 2, %s227
      %p229 = scmp.lt.s32.totalorder %s18, 1
      %s230 = scalar_select %p229, %s18, 1
      %p231 = scmp.lt.s32.totalorder %s228, 1
      %s232 = scalar_select %p231, %s228, 1
      %s233 = smul.addr %s230, 2
      %s234 = sadd.s32 %s232, %s233
      %s235 = smul.addr %s234, 4
      %s236 = scalar_lea.vmem %s0, %s235
      %s237 = sadd.s32 %s19, %s20
      %p238 = scmp.lt.s32.totalorder %s237, 0
      %s239 = scalar_select %p238, %s237, 0
      %s240 = smul.u32 2, %s239
      %s241 = sadd.s32 %s19, %s20
      %p242 = scmp.lt.s32.totalorder %s241, 0
      %s243 = scalar_select %p242, %s241, 0
      %s244 = smul.u32 2, %s243
      %p245 = scmp.lt.s32.totalorder %s18, 1
      %s246 = scalar_select %p245, %s18, 1
      %p247 = scmp.lt.s32.totalorder %s244, 1
      %s248 = scalar_select %p247, %s244, 1
      %s249 = smul.addr %s246, 2
      %s250 = sadd.s32 %s248, %s249
      %s251 = smul.addr %s250, 4
      %s252 = scalar_lea.vmem %s1, %s251
      %s253 = sadd.s32 %s19, %s20
      %p254 = scmp.lt.s32.totalorder %s253, 0
      %s255 = scalar_select %p254, %s253, 0
      %s256 = smul.u32 2, %s255
      %p257 = scmp.lt.s32.totalorder %s18, 1
      %s258 = scalar_select %p257, %s18, 1
      %p259 = scmp.lt.s32.totalorder %s19, 0
      %s260 = scalar_select %p259, %s19, 0
      %s261 = smul.addr %s260, 2
      %s262 = smul.addr %s258, 2
      %s263 = sadd.s32 %s261, %s262
      %s264 = scalar_lea.vmem %s2, %s263
      %p265 = scmp.eq.s32.totalorder %s20, 0
      // Predicated region
      $region29: #{linear_time_mmd_pallas.1} parent=27 // pred_check
        %p266 = pneg %p265
      $region30: #{linear_time_mmd_pallas.1} parent=27 // pred_check_branch
        %268 = sbr.rel (%p266) target = $region32
      $region31: #{linear_time_mmd_pallas.1} parent=27 // pred_region
        %v269 = vlaneseq
        %vm270 = vcmp.ge.s32.totalorder %v269, 0
        %vm271 = vcmp.lt.s32.totalorder %v269, 256
        %vm272 = vmand %vm270, %vm271
        %273 = vst.msk [vmem:[%s264] sm:$0x3] %vm272, 0.0
      $region32: #{linear_time_mmd_pallas.1} parent=27 // pred_fallthru
        _
      %v274 = vld [vmem:[%s236] sm:$0xff]
      %v275 = vld [vmem:[%s252] sm:$0xff]
      %v277 = vcombine.high %v274, %v274
      %278 = vrot.lane.b32.xlu0 %v274, 127
      %v279 = vpop.permute.xlu0 %278
      %280 = vrot.lane.b32.xlu0 %v277, 127
      %v281 = vpop.permute.xlu0 %280
      %vm282 = vcmask 1039360
      %v283 = vsel %vm282, %v279, %v281
      %v287 = vsel %vm282, %v281, %v279
      %v289 = vcombine.high %v275, %v275
      %290 = vrot.lane.b32.xlu0 %v275, 127
      %v291 = vpop.permute.xlu0 %290
      %292 = vrot.lane.b32.xlu0 %v289, 127
      %v293 = vpop.permute.xlu0 %292
      %v294 = vsel %vm282, %v291, %v293
      %v297 = vsel %vm282, %v293, %v291
      %v299 = vcombine.low %v283, %v287
      %v301 = vsub.f32 %v274, %v299
      %v302 = vmul.f32 %v301, %v301
      %v304 = vcombine.high %v302, %v302
      %vm306 = vcmask 1043456
      %v307 = vsel %vm306, %v302, 0.0
      %v308 = vrot.slane %v307, 4
      %v309 = vadd.f32 %v307, %v308
      %v310 = vrot.slane %v309, 2
      %v311 = vadd.f32 %v309, %v310
      %v312 = vrot.slane %v311, 1
      %v313 = vadd.f32 %v311, %v312
      %v314 = vsel %vm306, %v304, 0.0
      %v315 = vrot.slane %v314, 4
      %v316 = vadd.f32 %v314, %v315
      %v317 = vrot.slane %v316, 2
      %v318 = vadd.f32 %v316, %v317
      %v319 = vrot.slane %v318, 1
      %v320 = vadd.f32 %v318, %v319
      %v321 = vmul.f32 %v313, -0.1
      %v322 = vmul.f32 %v320, -0.1
      %v323 = vmul.f32 %v321, 1.442695
      %v324 = vpow.pop %v323
      %v325 = vmul.f32 %v322, 1.442695
      %v326 = vpow.pop %v325
      %v328 = vcombine.low %v294, %v297
      %v330 = vsub.f32 %v275, %v328
      %v331 = vmul.f32 %v330, %v330
      %v333 = vcombine.high %v331, %v331
      %v335 = vsel %vm306, %v331, 0.0
      %v336 = vrot.slane %v335, 4
      %v337 = vadd.f32 %v335, %v336
      %v338 = vrot.slane %v337, 2
      %v339 = vadd.f32 %v337, %v338
      %v340 = vrot.slane %v339, 1
      %v341 = vadd.f32 %v339, %v340
      %v342 = vsel %vm306, %v333, 0.0
      %v343 = vrot.slane %v342, 4
      %v344 = vadd.f32 %v342, %v343
      %v345 = vrot.slane %v344, 2
      %v346 = vadd.f32 %v344, %v345
      %v347 = vrot.slane %v346, 1
      %v348 = vadd.f32 %v346, %v347
      %v349 = vmul.f32 %v341, -0.1
      %v350 = vmul.f32 %v348, -0.1
      %v351 = vmul.f32 %v349, 1.442695
      %v352 = vpow.pop %v351
      %v353 = vmul.f32 %v350, 1.442695
      %v354 = vpow.pop %v353
      %v355 = vadd.f32 %v324, %v352
      %v356 = vadd.f32 %v326, %v354
      %v357 = vsub.f32 %v274, %v328
      %v358 = vmul.f32 %v357, %v357
      %v360 = vcombine.high %v358, %v358
      %v362 = vsel %vm306, %v358, 0.0
      %v363 = vrot.slane %v362, 4
      %v364 = vadd.f32 %v362, %v363
      %v365 = vrot.slane %v364, 2
      %v366 = vadd.f32 %v364, %v365
      %v367 = vrot.slane %v366, 1
      %v368 = vadd.f32 %v366, %v367
      %v369 = vsel %vm306, %v360, 0.0
      %v370 = vrot.slane %v369, 4
      %v371 = vadd.f32 %v369, %v370
      %v372 = vrot.slane %v371, 2
      %v373 = vadd.f32 %v371, %v372
      %v374 = vrot.slane %v373, 1
      %v375 = vadd.f32 %v373, %v374
      %v376 = vmul.f32 %v368, -0.1
      %v377 = vmul.f32 %v375, -0.1
      %v378 = vmul.f32 %v376, 1.442695
      %v379 = vpow.pop %v378
      %v380 = vmul.f32 %v377, 1.442695
      %v381 = vpow.pop %v380
      %v383 = vsub.f32 %v283, %v275
      %v384 = vsub.f32 %v287, %v289
      %v385 = vmul.f32 %v383, %v383
      %v386 = vmul.f32 %v384, %v384
      %v387 = vsel %vm306, %v385, 0.0
      %v388 = vrot.slane %v387, 4
      %v389 = vadd.f32 %v387, %v388
      %v390 = vrot.slane %v389, 2
      %v391 = vadd.f32 %v389, %v390
      %v392 = vrot.slane %v391, 1
      %v393 = vadd.f32 %v391, %v392
      %v394 = vsel %vm306, %v386, 0.0
      %v395 = vrot.slane %v394, 4
      %v396 = vadd.f32 %v394, %v395
      %v397 = vrot.slane %v396, 2
      %v398 = vadd.f32 %v396, %v397
      %v399 = vrot.slane %v398, 1
      %v400 = vadd.f32 %v398, %v399
      %v401 = vmul.f32 %v393, -0.1
      %v402 = vmul.f32 %v400, -0.1
      %v403 = vmul.f32 %v401, 1.442695
      %v404 = vpow.pop %v403
      %v405 = vmul.f32 %v402, 1.442695
      %v406 = vpow.pop %v405
      %v407 = vadd.f32 %v379, %v404
      %v408 = vadd.f32 %v381, %v406
      %v409 = vsub.f32 %v355, %v407
      %v410 = vsub.f32 %v356, %v408
      %s411 = sadd.s32 %s19, %s20
      %v412 = vlaneseq
      %v413 = vand.u32 %v412, 127
      %v414 = vadd.s32 %v413, 128
      %s415 = smul.u32 %s411, 256
      %v416 = vstv %s415
      %v417 = vadd.s32 %v416, %v413
      %v418 = vadd.s32 %v416, %v414
      %v419 = vand.u32 %v413, 1
      %v420 = vand.u32 %v414, 1
      %vm421 = vcmp.eq.s32.totalorder %v419, 0
      %vm422 = vcmp.eq.s32.totalorder %v420, 0
      %vm423 = vcmp.lt.s32.totalorder %v417, 256
      %vm424 = vcmp.lt.s32.totalorder %v418, 256
      %vm425 = vmand %vm421, %vm423
      %vm426 = vmand %vm422, %vm424
      %v427 = vld [vmem:[%s264] sm:$0x3]
      %v428 = vsel %vm425, %v409, 0.0
      %v429 = vsel %vm426, %v410, 0.0
      %v432 = vcombine.low %v428, %v429
      %v434 = vunpack.c.l.s4 1966171168
      %v435 = vunpack.c.0.s8 %v434
      %v436 = vlaneseq
      %v437 = vshrl.u32 %v436, 7
      %v438 = vsub.s32 %v435, %v437
      %v439 = vrot.slane %v432, %v438
      %v441 = vunpack.c.l.s4 1966171168
      %v442 = vunpack.c.0.s8 %v441
      %v443 = vlaneseq
      %v444 = vshrl.u32 %v443, 7
      %v445 = vsub.s32 %v442, %v444
      %v446 = vrot.slane %v439, %v445
      %v448 = vadd.f32 %v427, %v446
      %v449 = vlaneseq
      %vm450 = vcmp.ge.s32.totalorder %v449, 0
      %vm451 = vcmp.lt.s32.totalorder %v449, 256
      %vm452 = vmand %vm450, %vm451
      %453 = vst.msk [vmem:[%s264] sm:$0x3] %vm452, %v448
      %p454 = scmp.lt.s32.totalorder %s18, 1
      %s455 = scalar_select %p454, %s18, 1
      %p456 = scmp.lt.s32.totalorder %s19, 0
      %s457 = scalar_select %p456, %s19, 0
      %s458 = smul.addr %s457, 2
      %s459 = smul.addr %s455, 2
      %s460 = sadd.s32 %s458, %s459
      %s461 = scalar_lea.vmem %s2, %s460
      // Predicated region
      $region33: #{linear_time_mmd_pallas.1} parent=27 // pred_check
        %p462 = pneg %p120
      $region34: #{linear_time_mmd_pallas.1} parent=27 // pred_check_branch
        %464 = sbr.rel (%p462) target = $region36
      $region35: #{linear_time_mmd_pallas.1} parent=27 // pred_region
        _
      $region36: #{linear_time_mmd_pallas.1} parent=27 // pred_fallthru
        _
    $region28: #{linear_time_mmd_pallas.1} parent=5 // pred_fallthru
      _
    %p465 = scmp.le.s32.totalorder 2, %s8
    // Predicated region
    $region37: #{linear_time_mmd_pallas.1} parent=5 // pred_check
      %p466 = pneg %p465
    $region38: #{linear_time_mmd_pallas.1} parent=5 // pred_check_branch
      %468 = sbr.rel (%p466) target = $region40
    $region39: #{linear_time_mmd_pallas.1} parent=5 // pred_region
      %s469 = ssub.s32 %s8, 2
      // Predicated region
      $region41: #{linear_time_mmd_pallas.1} parent=39 // pred_check
        %p470 = pneg %p126
      $region42: #{linear_time_mmd_pallas.1} parent=39 // pred_check_branch
        %472 = sbr.rel (%p470) target = $region44
      $region43: #{linear_time_mmd_pallas.1} parent=39 // pred_region
        %p473 = scmp.lt.s32.totalorder %s21, 1
        %s474 = scalar_select %p473, %s21, 1
        %p475 = scmp.lt.s32.totalorder %s22, 0
        %s476 = scalar_select %p475, %s22, 0
        %s477 = smul.addr %s476, 2
        %s478 = smul.addr %s474, 2
        %s479 = sadd.s32 %s477, %s478
        %s480 = scalar_lea.vmem %s2, %s479
      $region44: #{linear_time_mmd_pallas.1} parent=39 // pred_fallthru
        _
    $region40: #{linear_time_mmd_pallas.1} parent=5 // pred_fallthru
      _
  $region6: #{linear_time_mmd_pallas.1} parent=0 // loop_footer
    %s12 = sadd.s32 1, %s8
  $region7: #{linear_time_mmd_pallas.1} parent=0 // loop_footer_branch
    %7 = sbr.rel target = $region3
  $region8: #{linear_time_mmd_pallas.1} parent=0 // loop_exit
    _

</llo_original>
